<compile_context>
chip_gen: v7x
topology: tpu7x:2x2x1
jax: 0.10.0
libtpu: 0.0.40
codegen_flags: <defaults>
</compile_context>

<pallas_src>
import functools
import math

import jax
import jax.numpy as jnp
from jax.experimental import pallas as pl
from jax.experimental.pallas import tpu as pltpu

_EPS = 1e-12          # matches torch.nn.functional.normalize default eps
_NEG_LARGE = -1e30    # finite "-inf" sentinel (no NaN from exp(-inf + inf))


def _round_up(a, m):
    return ((a + m - 1) // m) * m


def _vmem_capacity_bytes():
    try:
        return int(pltpu.get_tpu_info().vmem_capacity_bytes)
    except Exception:
        return 64 * 1024 * 1024          # conservative (v7x-sized) fallback


def _choose_tiles(B, C, D, vmem_cap, vmem_limit):
    Dp = _round_up(D, 128)                       # lane-aligned contraction dim
    TB = min(512, _round_up(B, 16))              # batch tile (16 covers bf16 sublane packing)
    Bp = _round_up(B, TB)
    tc_cap = 2048 if vmem_cap >= 96 * 1024 * 1024 else 1024   # v5e/v6e vs v7x
    TC = min(tc_cap, _round_up(C, 128))
    # keep (f32 in + bf16 out, double-buffered) weight tiles well inside the VMEM budget
    while TC > 128 and Dp * TC * 12 > vmem_limit // 2:
        TC = _round_up(TC // 2, 128)
    Cp = _round_up(C, TC)
    return TB, TC, Bp, Cp, Dp


def _normalize_w_kernel(w_ref, wnt_ref):
    """L2-normalize rows of one (TC, Dp) weight tile; emit transposed (Dp, TC) bf16."""
    w = w_ref[...].astype(jnp.float32)
    inv = jax.lax.rsqrt(jnp.maximum(jnp.sum(w * w, axis=1, keepdims=True), _EPS * _EPS))
    wnt_ref[...] = (w * inv).T.astype(wnt_ref.dtype)


def _normalize_x_kernel(x_ref, xn_ref, *, scale):
    """L2-normalize rows of one (TB, Dp) x tile, fold the AM-softmax scale in, emit bf16."""
    x = x_ref[...].astype(jnp.float32)
    inv = jax.lax.rsqrt(jnp.maximum(jnp.sum(x * x, axis=1, keepdims=True), _EPS * _EPS))
    xn_ref[...] = (x * inv * scale).astype(xn_ref.dtype)


def _am_focal_kernel(tgt_ref, xn_ref, wnt_ref, loss_ref, m_sc, l_sc, t_sc,
                     *, scaled_margin, c_valid, c_padded, batch, gamma, xn_resident):
    """Online-logsumexp AM-softmax CE with fused focal reduction.

    grid = (class tiles [outer, reduction], batch tiles [inner]); the weight tile is
    fetched once per outer step, accumulators live in (Bp,1) VMEM scratch.
    """
    c = pl.program_id(0)                 # class-tile index (outer)
    b = pl.program_id(1)                 # batch-tile index (inner)
    tb = tgt_ref.shape[0]
    tc = wnt_ref.shape[1]
    off = pl.multiple_of(b * tb, tb)

    @pl.when(c == 0)
    def _init():
        m_sc[pl.ds(off, tb), :] = jnp.full((tb, 1), _NEG_LARGE, jnp.float32)
        l_sc[pl.ds(off, tb), :] = jnp.zeros((tb, 1), jnp.float32)
        t_sc[pl.ds(off, tb), :] = jnp.zeros((tb, 1), jnp.float32)

    x = xn_ref[pl.ds(off, tb), :] if xn_resident else xn_ref[...]     # (TB, Dp) bf16
    # (TB, TC) score tile: bf16 x bf16 -> f32 on the MXU, RHS already in [K, N] layout.
    score = jax.lax.dot_general(x, wnt_ref[...], (((1,), (0,)), ((), ())),
                                preferred_element_type=jnp.float32)

    col = jax.lax.broadcasted_iota(jnp.int32, (tb, tc), 1)
    tgt_local = tgt_ref[...] - c * tc                  # shift target instead of the iota
    is_tgt = col == tgt_local                          # (TB, TC) via (TB, 1) broadcast
    if c_valid < c_padded:                             # static: mask zero-padded classes
        score = jnp.where(col < (c_valid - c * tc), score, _NEG_LARGE)
    if scaled_margin != 0.0:                           # static: additive margin (pre-scaled)
        score = jnp.where(is_tgt, score - scaled_margin, score)

    # Online logsumexp across class tiles (outer grid axis).
    m_prev = m_sc[pl.ds(off, tb), :]
    m_new = jnp.maximum(m_prev, jnp.max(score, axis=1, keepdims=True))
    alpha = jnp.exp(m_prev - m_new)
    l_sc[pl.ds(off, tb), :] = alpha * l_sc[pl.ds(off, tb), :] + jnp.sum(
        jnp.exp(score - m_new), axis=1, keepdims=True)
    t_sc[pl.ds(off, tb), :] = t_sc[pl.ds(off, tb), :] + jnp.sum(
        jnp.where(is_tgt, score, 0.0), axis=1, keepdims=True)
    m_sc[pl.ds(off, tb), :] = m_new

    @pl.when(jnp.logical_and(c == pl.num_programs(0) - 1, b == pl.num_programs(1) - 1))
    def _finalize():
        ce = m_sc[...] + jnp.log(l_sc[...]) - t_sc[...]          # (Bp, 1) per-sample CE
        row = jax.lax.broadcasted_iota(jnp.int32, ce.shape, 0)
        logp = jnp.sum(jnp.where(row < batch, ce, 0.0)) / float(batch)
        p = jnp.exp(-logp)
        g = float(gamma)
        focal = (1.0 - p) ** (int(g) if g == int(g) else g)
        loss_ref[0] = focal * logp


def am_classifier_loss(x, id_agent, target, *, scale, margin, gamma=2.0,
                       training=True, compute_dtype=jnp.bfloat16):
    """JAX wrapper mirroring AMClassifier.forward((x, target)) -> loss of shape (1,)."""
    B, D = x.shape
    C, D2 = id_agent.shape
    assert D == D2
    vmem_cap = _vmem_capacity_bytes()
    # ~48 MiB scoped on 64-MiB-VMEM parts (v7x), ~96 MiB on 128-MiB parts (v5e/v6e).
    vmem_limit = int(min(vmem_cap * 3 // 4, 100 * 1024 * 1024))
    TB, TC, Bp, Cp, Dp = _choose_tiles(B, C, D, vmem_cap, vmem_limit)
    nbt, nct = Bp // TB, Cp // TC

    # One-time cast+pad (zero padding is exact for L2 norms / dot products).
    xp = jnp.pad(x.astype(jnp.float32), ((0, Bp - B), (0, Dp - D)))
    wp = jnp.pad(id_agent.astype(jnp.float32), ((0, Cp - C), (0, Dp - D)))
    tp = jnp.pad(target.astype(jnp.int32), (0, Bp - B)).reshape(Bp, 1)

    # 1) Normalize the weight once, emit it transposed (Dp, Cp) in bf16.
    wnt = pl.pallas_call(
        _normalize_w_kernel,
        out_shape=jax.ShapeDtypeStruct((Dp, Cp), compute_dtype),
        grid_spec=pltpu.PrefetchScalarGridSpec(
            num_scalar_prefetch=0, grid=(nct,),
            in_specs=[pl.BlockSpec((TC, Dp), lambda i: (i, 0))],
            out_specs=pl.BlockSpec((Dp, TC), lambda i: (0, i))),
        compiler_params=pltpu.CompilerParams(
            dimension_semantics=("parallel",), vmem_limit_bytes=vmem_limit),
    )(wp)

    # 2) Normalize x once, fold the scale in, emit bf16.
    xn = pl.pallas_call(
        functools.partial(_normalize_x_kernel, scale=float(scale)),
        out_shape=jax.ShapeDtypeStruct((Bp, Dp), compute_dtype),
        grid_spec=pltpu.PrefetchScalarGridSpec(
            num_scalar_prefetch=0, grid=(nbt,),
            in_specs=[pl.BlockSpec((TB, Dp), lambda i: (i, 0))],
            out_specs=pl.BlockSpec((TB, Dp), lambda i: (i, 0))),
        compiler_params=pltpu.CompilerParams(dimension_semantics=("parallel",)),
    )(xp)

    eff_margin = float(margin) if (training and margin > 0) else 0.0
    xn_resident = (Bp * Dp * 2) <= 8 * 1024 * 1024   # keep full xn resident when small
    kernel = functools.partial(
        _am_focal_kernel,
        scaled_margin=float(scale) * eff_margin,
        c_valid=C, c_padded=Cp, batch=B, gamma=float(gamma), xn_resident=xn_resident)

    if xn_resident:
        xn_spec = pl.BlockSpec((Bp, Dp), lambda c, b: (0, 0))    # constant index -> one DMA
    else:
        xn_spec = pl.BlockSpec((TB, Dp), lambda c, b: (b, 0))    # stream small bf16 x tiles

    # 3) Fused AM-softmax CE + focal loss.  Class tiles on the outer (reduction) axis so
    #    each bf16 weight tile is DMA'd exactly once; batch tiles inner.
    loss = pl.pallas_call(
        kernel,
        out_shape=jax.ShapeDtypeStruct((1,), jnp.float32),
        grid_spec=pltpu.PrefetchScalarGridSpec(
            num_scalar_prefetch=0, grid=(nct, nbt),
            in_specs=[
                pl.BlockSpec((TB, 1), lambda c, b: (b, 0)),      # target  (int32)
                xn_spec,                                         # scale * normalize(x), bf16
                pl.BlockSpec((Dp, TC), lambda c, b: (0, c)),     # wn^T tile, bf16
            ],
            out_specs=pl.BlockSpec(memory_space=pltpu.MemorySpace.SMEM),
            scratch_shapes=[
                pltpu.VMEM((Bp, 1), jnp.float32),   # running max
                pltpu.VMEM((Bp, 1), jnp.float32),   # running sum(exp)
                pltpu.VMEM((Bp, 1), jnp.float32),   # target logit
            ]),
        compiler_params=pltpu.CompilerParams(
            # focal reduction at the last step needs all batch tiles on one core
            dimension_semantics=("arbitrary", "arbitrary"),
            vmem_limit_bytes=vmem_limit),
        cost_estimate=pl.CostEstimate(
            flops=2 * Bp * Cp * Dp,
            transcendentals=Bp * Cp,
            bytes_accessed=2 * Cp * Dp + 2 * Bp * Dp * (1 if xn_resident else nct)
                           + 4 * Bp + 4),
    )(tp, xn, wnt)
    return loss


def _reference_loss(x, id_agent, target, *, scale, margin, gamma=2.0, training=True):
    """Torch-faithful pure-JAX reference (f32 matmul, margin on cos, then scale)."""
    eps = 1e-12
    xn = x / jnp.maximum(jnp.linalg.norm(x, axis=1, keepdims=True), eps)
    wn = id_agent / jnp.maximum(jnp.linalg.norm(id_agent, axis=1, keepdims=True), eps)
    score = jax.lax.dot_general(xn, wn, (((1,), (1,)), ((), ())),
                                preferred_element_type=jnp.float32,
                                precision=jax.lax.Precision.HIGHEST)
    onehot = jax.nn.one_hot(target, id_agent.shape[0], dtype=jnp.float32)
    if training and margin > 0:
        score = score - margin * onehot
    score = score * scale
    row_max = jnp.max(score, axis=1, keepdims=True)
    lse = row_max[:, 0] + jnp.log(jnp.sum(jnp.exp(score - row_max), axis=1))
    logp = jnp.mean(lse - jnp.sum(score * onehot, axis=1))
    p = jnp.exp(-logp)
    return (((1.0 - p) ** gamma) * logp)[None]


def _mimic_loss(x, id_agent, target, *, scale, margin, gamma=2.0, training=True,
                compute_dtype=jnp.bfloat16):
    """Pure-JAX model of the kernel's exact op order (rsqrt normalize, scale folded into x,
    bf16 MXU operands, f32 accumulation) for a tight correctness check."""
    inv_x = jax.lax.rsqrt(jnp.maximum(jnp.sum(x * x, axis=1, keepdims=True), _EPS * _EPS))
    inv_w = jax.lax.rsqrt(
        jnp.maximum(jnp.sum(id_agent * id_agent, axis=1, keepdims=True), _EPS * _EPS))
    xs = (x * inv_x * scale).astype(compute_dtype)
    wn = (id_agent * inv_w).astype(compute_dtype)
    score = jax.lax.dot_general(xs, wn, (((1,), (1,)), ((), ())),
                                preferred_element_type=jnp.float32)
    onehot = jnp.arange(id_agent.shape[0])[None, :] == target[:, None]
    if training and margin > 0:
        score = jnp.where(onehot, score - scale * margin, score)
    row_max = jnp.max(score, axis=1, keepdims=True)
    lse = row_max[:, 0] + jnp.log(jnp.sum(jnp.exp(score - row_max), axis=1))
    logp = jnp.mean(lse - jnp.sum(jnp.where(onehot, score, 0.0), axis=1))
    p = jnp.exp(-logp)
    return (((1.0 - p) ** gamma) * logp)[None]


if __name__ == "__main__":
    # cfg: feature_dim=32, train_class_range=(0, 16), scale=30.0, margin=0.35
    batch, feature_dim, class_num = 8, 32, 16
    scale, margin = 30.0, 0.35

    key = jax.random.PRNGKey(0)
    kx, kw, kt = jax.random.split(key, 3)
    x = jax.random.normal(kx, (batch, feature_dim), dtype=jnp.float32)
    stdv = 1.0 / math.sqrt(feature_dim)
    id_agent = jax.random.uniform(kw, (class_num, feature_dim),
                                  minval=-stdv, maxval=stdv, dtype=jnp.float32)
    target = jax.random.randint(kt, (batch,), 0, class_num, dtype=jnp.int32)

    loss = am_classifier_loss(x, id_agent, target, scale=scale, margin=margin, training=True)
    loss = jax.block_until_ready(loss)
    assert loss.shape == (1,)
    assert bool(jnp.isfinite(loss).all())

    mimic = _mimic_loss(x, id_agent, target, scale=scale, margin=margin, training=True)
    ref = _reference_loss(x, id_agent, target, scale=scale, margin=margin, training=True)
    # Tight check vs a pure-JAX model of the kernel's exact op order / bf16 cast points.
    assert jnp.allclose(loss, mimic, rtol=2e-3, atol=2e-3), (loss, mimic)
    # Loose check vs the torch-faithful f32 reference (bf16 MXU operands => ~1% slack).
    assert jnp.allclose(loss, ref, rtol=5e-2, atol=5e-2), (loss, ref)

    print("KERNEL_OK")
</pallas_src>

<mosaic_0001>
module attributes {stable_mosaic.version = 11 : i64} {
  func.func @_normalize_w_kernel(%arg0: i32, %arg1: memref<128x128xf32, #tpu.memory_space<vmem>>, %arg2: memref<128x128xbf16, #tpu.memory_space<vmem>>) attributes {dimension_semantics = [#tpu.dimension_semantics<parallel>], iteration_bounds = array<i64: 1>, scalar_prefetch = 0 : i64, scratch_operands = 0 : i64, tpu.core_type = #tpu.core_type<tc>, window_params = [{transform_indices = @transform_0, window_bounds = array<i64: 128, 128>}, {transform_indices = @transform_1, window_bounds = array<i64: 128, 128>}]} {
    %c0 = arith.constant 0 : index
    %c0_0 = arith.constant 0 : index
    %0 = vector.load %arg1[%c0, %c0_0] : memref<128x128xf32, #tpu.memory_space<vmem>>, vector<128x128xf32>
    %1 = arith.mulf %0, %0 : vector<128x128xf32>
    %cst = arith.constant dense<0.000000e+00> : vector<128xf32>
    %2 = vector.multi_reduction <add>, %1, %cst [1] : vector<128x128xf32> to vector<128xf32>
    %3 = vector.shape_cast %2 : vector<128xf32> to vector<128x1xf32>
    %cst_1 = arith.constant 1.000000e-24 : f32
    %4 = vector.broadcast %cst_1 : f32 to vector<128x1xf32>
    %5 = arith.maximumf %3, %4 : vector<128x1xf32>
    %6 = math.rsqrt %5 : vector<128x1xf32>
    %7 = vector.broadcast %6 : vector<128x1xf32> to vector<128x128xf32>
    %8 = arith.mulf %0, %7 : vector<128x128xf32>
    %9 = tpu.transpose %8, [1, 0] : vector<128x128xf32> -> vector<128x128xf32>
    %10 = arith.truncf %9 : vector<128x128xf32> to vector<128x128xbf16>
    %c0_2 = arith.constant 0 : index
    %c0_3 = arith.constant 0 : index
    %11 = vector.load %arg2[%c0_2, %c0_3] : memref<128x128xbf16, #tpu.memory_space<vmem>>, vector<128x128xbf16>
    tpu.vector_store %arg2[%c0_2, %c0_3], %10 {strides = array<i32>} : memref<128x128xbf16, #tpu.memory_space<vmem>>, vector<128x128xbf16>,
    return
  }
  func.func @transform_0(%arg0: i32) -> (i32, i32) {
    %c0_i32 = arith.constant 0 : i32
    %c0_i32_0 = arith.constant 0 : i32
    return %arg0, %c0_i32 : i32, i32
  }
  func.func @transform_1(%arg0: i32) -> (i32, i32) {
    %c0_i32 = arith.constant 0 : i32
    %c0_i32_0 = arith.constant 0 : i32
    return %c0_i32, %arg0 : i32, i32
  }
}

</mosaic_0001>

<llo_original>
// kernel: tpu_custom_call.1
$region0: #{tpu_custom_call.1}
  #allocation0 [shape = 'u32[]', space=smem, size = 0x4, offset = 0x4, fixed_abs, tag = 'smem constant byte address 0x4 - core index']
  #allocation1 [shape = 'u32[144,128]{1,0:T(1,128)}', space=vmem, size = 0x12000, scoped, tag = 'internal scratch']
  %s0 = inlined_call_operand.hbm [shape: f32[128,128], index: 0, kind: input, shape index: {}]
  %s1 = inlined_call_operand.hbm [shape: bf16[128,128], index: 1, kind: output, shape index: {}]
  %s2 = sld [smem:[#allocation0]]
  $region18: #{tpu_custom_call.1} parent=0
    _
  %s4 = ssub.s32 1, %s2
  %s5 = scalar_select 0, %s4, %s2
  $region1: #{tpu_custom_call.1} parent=0
    #allocation2 [shape = 'u8[65536]{0}', space=vmem, size = 0x10000, scoped, tag = 'input window, operand 0, single buffered']
    #allocation3 [shape = 's32[1]{0}', space=sflag, size = 0x4, scoped, tag = 'scoped memory for tpu_custom_call.1']
    #allocation4 [shape = 's32[1]{0}', space=sflag, size = 0x4, scoped, tag = 'scoped memory for tpu_custom_call.1']
    #allocation5 [shape = 'u8[32768]{0}', space=vmem, size = 0x8000, scoped, tag = 'output window, operand 0, single buffered']
    %6 = vsyncpa [#allocation3], 0
    %7 = vsyncpa [#allocation4], 0
    // Predicated region
    $region2: #{tpu_custom_call.1} parent=1 // pred_check
      _
    $region3: #{tpu_custom_call.1} parent=1 // pred_check_branch
      %9 = sbr.rel (0) target = $region5
    $region4: #{tpu_custom_call.1} parent=1 // pred_region
      %s11 = ssub.s32 2048, 2048
      %12 = vsyncadd [#allocation3], %s11
      %s13 = sshll.u32 [#allocation2], 4
      %s14 = int_to_ptr.vmem [resolvable:$true] %s13
      %19 = dma.hbm_to_vmem [thread:$0]  %s0, 2048, %s14, [#allocation3], 128, 128, 8
    $region5: #{tpu_custom_call.1} parent=1 // pred_fallthru
      _
    // Predicated region
    $region6: #{tpu_custom_call.1} parent=1 // pred_check
      _
    $region7: #{tpu_custom_call.1} parent=1 // pred_check_branch
      %21 = sbr.rel (0) target = $region9
    $region8: #{tpu_custom_call.1} parent=1 // pred_region
      %22 = dma.done [#allocation3], 2048
    $region9: #{tpu_custom_call.1} parent=1 // pred_fallthru
      _
    %v23 = vld [vmem:[#allocation2] sm:$0xff]
    %v24 = vld [vmem:[#allocation2 + $0x8] sm:$0xff]
    %v25 = vld [vmem:[#allocation2 + $0x10] sm:$0xff]
    %v26 = vld [vmem:[#allocation2 + $0x18] sm:$0xff]
    %v27 = vld [vmem:[#allocation2 + $0x20] sm:$0xff]
    %v28 = vld [vmem:[#allocation2 + $0x28] sm:$0xff]
    %v29 = vld [vmem:[#allocation2 + $0x30] sm:$0xff]
    %v30 = vld [vmem:[#allocation2 + $0x38] sm:$0xff]
    %v31 = vld [vmem:[#allocation2 + $0x40] sm:$0xff]
    %v32 = vld [vmem:[#allocation2 + $0x48] sm:$0xff]
    %v33 = vld [vmem:[#allocation2 + $0x50] sm:$0xff]
    %v34 = vld [vmem:[#allocation2 + $0x58] sm:$0xff]
    %v35 = vld [vmem:[#allocation2 + $0x60] sm:$0xff]
    %v36 = vld [vmem:[#allocation2 + $0x68] sm:$0xff]
    %v37 = vld [vmem:[#allocation2 + $0x70] sm:$0xff]
    %v38 = vld [vmem:[#allocation2 + $0x78] sm:$0xff]
    %v39 = vmul.f32 %v23, %v23
    %v40 = vmul.f32 %v24, %v24
    %v41 = vmul.f32 %v25, %v25
    %v42 = vmul.f32 %v26, %v26
    %v43 = vmul.f32 %v27, %v27
    %v44 = vmul.f32 %v28, %v28
    %v45 = vmul.f32 %v29, %v29
    %v46 = vmul.f32 %v30, %v30
    %v47 = vmul.f32 %v31, %v31
    %v48 = vmul.f32 %v32, %v32
    %v49 = vmul.f32 %v33, %v33
    %v50 = vmul.f32 %v34, %v34
    %v51 = vmul.f32 %v35, %v35
    %v52 = vmul.f32 %v36, %v36
    %v53 = vmul.f32 %v37, %v37
    %v54 = vmul.f32 %v38, %v38
    %55 = vadd.xlane.f32.xlu0 %v39
    %v56 = vpop.xlane.xlu0 %55
    %57 = vadd.xlane.f32.xlu0 %v40
    %v58 = vpop.xlane.xlu0 %57
    %59 = vadd.xlane.f32.xlu0 %v41
    %v60 = vpop.xlane.xlu0 %59
    %61 = vadd.xlane.f32.xlu0 %v42
    %v62 = vpop.xlane.xlu0 %61
    %63 = vadd.xlane.f32.xlu0 %v43
    %v64 = vpop.xlane.xlu0 %63
    %65 = vadd.xlane.f32.xlu0 %v44
    %v66 = vpop.xlane.xlu0 %65
    %67 = vadd.xlane.f32.xlu0 %v45
    %v68 = vpop.xlane.xlu0 %67
    %69 = vadd.xlane.f32.xlu0 %v46
    %v70 = vpop.xlane.xlu0 %69
    %71 = vadd.xlane.f32.xlu0 %v47
    %v72 = vpop.xlane.xlu0 %71
    %73 = vadd.xlane.f32.xlu0 %v48
    %v74 = vpop.xlane.xlu0 %73
    %75 = vadd.xlane.f32.xlu0 %v49
    %v76 = vpop.xlane.xlu0 %75
    %77 = vadd.xlane.f32.xlu0 %v50
    %v78 = vpop.xlane.xlu0 %77
    %79 = vadd.xlane.f32.xlu0 %v51
    %v80 = vpop.xlane.xlu0 %79
    %81 = vadd.xlane.f32.xlu0 %v52
    %v82 = vpop.xlane.xlu0 %81
    %83 = vadd.xlane.f32.xlu0 %v53
    %v84 = vpop.xlane.xlu0 %83
    %85 = vadd.xlane.f32.xlu0 %v54
    %v86 = vpop.xlane.xlu0 %85
    %v87 = vmax.f32 %v56, 1e-24
    %v88 = vmax.f32 %v58, 1e-24
    %v89 = vmax.f32 %v60, 1e-24
    %v90 = vmax.f32 %v62, 1e-24
    %v91 = vmax.f32 %v64, 1e-24
    %v92 = vmax.f32 %v66, 1e-24
    %v93 = vmax.f32 %v68, 1e-24
    %v94 = vmax.f32 %v70, 1e-24
    %v95 = vmax.f32 %v72, 1e-24
    %v96 = vmax.f32 %v74, 1e-24
    %v97 = vmax.f32 %v76, 1e-24
    %v98 = vmax.f32 %v78, 1e-24
    %v99 = vmax.f32 %v80, 1e-24
    %v100 = vmax.f32 %v82, 1e-24
    %v101 = vmax.f32 %v84, 1e-24
    %v102 = vmax.f32 %v86, 1e-24
    %v103 = vrsqrt.pop %v87
    %v104 = vrsqrt.pop %v88
    %v105 = vrsqrt.pop %v89
    %v106 = vrsqrt.pop %v90
    %v107 = vrsqrt.pop %v91
    %v108 = vrsqrt.pop %v92
    %v109 = vrsqrt.pop %v93
    %v110 = vrsqrt.pop %v94
    %v111 = vrsqrt.pop %v95
    %v112 = vrsqrt.pop %v96
    %v113 = vrsqrt.pop %v97
    %v114 = vrsqrt.pop %v98
    %v115 = vrsqrt.pop %v99
    %v116 = vrsqrt.pop %v100
    %v117 = vrsqrt.pop %v101
    %v118 = vrsqrt.pop %v102
    %v119 = vmul.f32 %v23, %v103
    %v120 = vmul.f32 %v24, %v104
    %v121 = vmul.f32 %v25, %v105
    %v122 = vmul.f32 %v26, %v106
    %v123 = vmul.f32 %v27, %v107
    %v124 = vmul.f32 %v28, %v108
    %v125 = vmul.f32 %v29, %v109
    %v126 = vmul.f32 %v30, %v110
    %v127 = vmul.f32 %v31, %v111
    %v128 = vmul.f32 %v32, %v112
    %v129 = vmul.f32 %v33, %v113
    %v130 = vmul.f32 %v34, %v114
    %v131 = vmul.f32 %v35, %v115
    %v132 = vmul.f32 %v36, %v116
    %v133 = vmul.f32 %v37, %v117
    %v134 = vmul.f32 %v38, %v118
    %135 = vxpose.xlu0.b32.start [1/16] %v119, 128
    %136 = vxpose.xlu0.b32.cont [2/16] %v120, 128
    %137 = vxpose.xlu0.b32.cont [3/16] %v121, 128
    %138 = vxpose.xlu0.b32.cont [4/16] %v122, 128
    %139 = vxpose.xlu0.b32.cont [5/16] %v123, 128
    %140 = vxpose.xlu0.b32.cont [6/16] %v124, 128
    %141 = vxpose.xlu0.b32.cont [7/16] %v125, 128
    %142 = vxpose.xlu0.b32.cont [8/16] %v126, 128
    %143 = vxpose.xlu0.b32.cont [9/16] %v127, 128
    %144 = vxpose.xlu0.b32.cont [10/16] %v128, 128
    %145 = vxpose.xlu0.b32.cont [11/16] %v129, 128
    %146 = vxpose.xlu0.b32.cont [12/16] %v130, 128
    %147 = vxpose.xlu0.b32.cont [13/16] %v131, 128
    %148 = vxpose.xlu0.b32.cont [14/16] %v132, 128
    %149 = vxpose.xlu0.b32.cont [15/16] %v133, 128
    %150 = vxpose.xlu0.b32.end [16/16] %v134, 128
    %v151 = vpop.trf.xlu0
    %v152 = vpop.trf.xlu0
    %v153 = vpop.trf.xlu0
    %v154 = vpop.trf.xlu0
    %v155 = vpop.trf.xlu0
    %v156 = vpop.trf.xlu0
    %v157 = vpop.trf.xlu0
    %v158 = vpop.trf.xlu0
    %v159 = vpop.trf.xlu0
    %v160 = vpop.trf.xlu0
    %v161 = vpop.trf.xlu0
    %v162 = vpop.trf.xlu0
    %v163 = vpop.trf.xlu0
    %v164 = vpop.trf.xlu0
    %v165 = vpop.trf.xlu0
    %v166 = vpop.trf.xlu0
    %v167 = vpack.c.bf16 %v152, %v151
    %v168 = vpack.c.bf16 %v154, %v153
    %v169 = vpack.c.bf16 %v156, %v155
    %v170 = vpack.c.bf16 %v158, %v157
    %v171 = vpack.c.bf16 %v160, %v159
    %v172 = vpack.c.bf16 %v162, %v161
    %v173 = vpack.c.bf16 %v164, %v163
    %v174 = vpack.c.bf16 %v166, %v165
    %v183 = vunpack.c.l.b16 %v167
    %v184 = vunpack.c.h.b16 %v167
    %v185 = vunpack.c.l.b16 %v168
    %v186 = vunpack.c.h.b16 %v168
    %v187 = vunpack.c.l.b16 %v169
    %v188 = vunpack.c.h.b16 %v169
    %v189 = vunpack.c.l.b16 %v170
    %v190 = vunpack.c.h.b16 %v170
    %v191 = vunpack.c.l.b16 %v171
    %v192 = vunpack.c.h.b16 %v171
    %v193 = vunpack.c.l.b16 %v172
    %v194 = vunpack.c.h.b16 %v172
    %v195 = vunpack.c.l.b16 %v173
    %v196 = vunpack.c.h.b16 %v173
    %v197 = vunpack.c.l.b16 %v174
    %v198 = vunpack.c.h.b16 %v174
    %v199 = vpack.c.b16 %v183, %v183
    %v200 = vpack.c.b16 %v184, %v184
    %v201 = vpack.c.b16 %v185, %v185
    %v202 = vpack.c.b16 %v186, %v186
    %v203 = vpack.c.b16 %v187, %v187
    %v204 = vpack.c.b16 %v188, %v188
    %v205 = vpack.c.b16 %v189, %v189
    %v206 = vpack.c.b16 %v190, %v190
    %v207 = vpack.c.b16 %v191, %v191
    %v208 = vpack.c.b16 %v192, %v192
    %v209 = vpack.c.b16 %v193, %v193
    %v210 = vpack.c.b16 %v194, %v194
    %v211 = vpack.c.b16 %v195, %v195
    %v212 = vpack.c.b16 %v196, %v196
    %v213 = vpack.c.b16 %v197, %v197
    %v214 = vpack.c.b16 %v198, %v198
    %231 = vst [vmem:[#allocation5] sm:$0xf] %v199
    %232 = vst [vmem:[#allocation5 + $0x4] sm:$0xf] %v200
    %233 = vst [vmem:[#allocation5 + $0x8] sm:$0xf] %v201
    %234 = vst [vmem:[#allocation5 + $0xc] sm:$0xf] %v202
    %235 = vst [vmem:[#allocation5 + $0x10] sm:$0xf] %v203
    %236 = vst [vmem:[#allocation5 + $0x14] sm:$0xf] %v204
    %237 = vst [vmem:[#allocation5 + $0x18] sm:$0xf] %v205
    %238 = vst [vmem:[#allocation5 + $0x1c] sm:$0xf] %v206
    %239 = vst [vmem:[#allocation5 + $0x20] sm:$0xf] %v207
    %240 = vst [vmem:[#allocation5 + $0x24] sm:$0xf] %v208
    %241 = vst [vmem:[#allocation5 + $0x28] sm:$0xf] %v209
    %242 = vst [vmem:[#allocation5 + $0x2c] sm:$0xf] %v210
    %243 = vst [vmem:[#allocation5 + $0x30] sm:$0xf] %v211
    %244 = vst [vmem:[#allocation5 + $0x34] sm:$0xf] %v212
    %245 = vst [vmem:[#allocation5 + $0x38] sm:$0xf] %v213
    %246 = vst [vmem:[#allocation5 + $0x3c] sm:$0xf] %v214
    // Predicated region
    $region10: #{tpu_custom_call.1} parent=1 // pred_check
      _
    $region11: #{tpu_custom_call.1} parent=1 // pred_check_branch
      %248 = sbr.rel (0) target = $region13
    $region12: #{tpu_custom_call.1} parent=1 // pred_region
      %s250 = ssub.s32 1024, 1024
      %251 = vsyncadd [#allocation4], %s250
      %s252 = sshll.u32 [#allocation5], 4
      %s253 = int_to_ptr.vmem [resolvable:$true] %s252
      %258 = dma.vmem_to_hbm [thread:$0]  %s253, 1024, %s1, [#allocation4], 64, 64, 4
    $region13: #{tpu_custom_call.1} parent=1 // pred_fallthru
      _
    // Predicated region
    $region14: #{tpu_custom_call.1} parent=1 // pred_check
      _
    $region15: #{tpu_custom_call.1} parent=1 // pred_check_branch
      %260 = sbr.rel (0) target = $region17
    $region16: #{tpu_custom_call.1} parent=1 // pred_region
      %261 = dma.done [#allocation4], 1024
    $region17: #{tpu_custom_call.1} parent=1 // pred_fallthru
      _
    %262 = vsyncpa [#allocation3], 1
    %263 = vsyncpa [#allocation4], 1

</llo_original>
